<compile_context>
chip_gen: v5e
topology: v5e:2x2
jax: 0.10.0
libtpu: 0.0.40
codegen_flags: <defaults>
</compile_context>

<pallas_src>
import jax
import jax.numpy as jnp
import numpy as np
from jax.experimental import pallas as pl
from jax.experimental.pallas import tpu as pltpu

ETA_CONST = -1.38
K_CONST = 1.0
EPS = 1e-7
TEMP = 0.1

_LANE = 128             # lane tile (last dim)
_SUB = 8                # sublane granularity
_MAX_BLOCK_ROWS = 8192  # (8192, 128) f32 block = 4 MiB per buffer
_SMALL_N = 64 * 1024    # below this, a fused XLA elementwise op beats a pallas_call


def _round_up(v, m):
    return (v + m - 1) // m * m


def _scale_kernel(scale_ref, x_ref, o_ref):
    """o = x * scale  (scale is a precomputed f32 scalar living in SMEM)."""
    s = scale_ref[0]
    o_ref[...] = (x_ref[...].astype(jnp.float32) * s).astype(o_ref.dtype)


def _concrete_dropout_scale(z_phi, u, k):
    """Scalar concrete-dropout math (matches the PyTorch concretedp branch)."""
    z = jnp.asarray(z_phi, jnp.float32).reshape(())
    uu = jnp.asarray(u, jnp.float32).reshape(())
    pi = jax.nn.sigmoid(jnp.float32(k) * z)
    logits = (jnp.log(pi + EPS) - jnp.log(1.0 - pi + EPS)
              + jnp.log(uu + EPS) - jnp.log(1.0 - uu + EPS))
    drop_prob = jax.nn.sigmoid(logits / jnp.float32(TEMP))
    return (1.0 - drop_prob) / (1.0 - pi)  # scalar f32


def dropout_variants_forward(x, z_phi, u, *, k=K_CONST, donate=False):
    """Training-mode forward of Dropout_variants (concretedp branch)."""
    orig_shape = x.shape
    dtype = x.dtype
    itemsize = jnp.dtype(dtype).itemsize

    scale = _concrete_dropout_scale(z_phi, u, k)  # scalar f32

    flat = x.reshape(-1)
    n = flat.shape[0]

    # ---- tiny-tensor fast path: kernel launch overhead would dominate ----
    if n < _SMALL_N:
        return (flat.astype(jnp.float32) * scale).astype(dtype).reshape(orig_shape)

    # ---- lane-aligned prefix through the kernel, <128-element tail via jnp ----
    n_tail = n % _LANE
    n_main = n - n_tail
    rows = n_main // _LANE
    x2 = (flat[:n_main] if n_tail else flat).reshape(rows, _LANE)

    # At least 2 grid steps so v7x's two TensorCores both get work; blocks capped
    # at 4 MiB/buffer (f32).
    n_steps = max(2, pl.cdiv(rows, _MAX_BLOCK_ROWS))
    block_rows = _round_up(pl.cdiv(rows, n_steps), _SUB)
    grid = (pl.cdiv(rows, block_rows),)

    # in + out, double-buffered (4 buffers), plus a little slack.
    block_bytes = block_rows * _LANE * itemsize
    vmem_limit = int(4 * block_bytes + (2 << 20))

    scale_arr = scale.reshape(1).astype(jnp.float32)

    extra_kwargs = {}
    if donate:
        # Dropout scaling is naturally in-place; use only when x can be donated.
        extra_kwargs["input_output_aliases"] = {1: 0}

    out2 = pl.pallas_call(
        _scale_kernel,
        out_shape=jax.ShapeDtypeStruct((rows, _LANE), dtype),
        grid_spec=pltpu.PrefetchScalarGridSpec(
            num_scalar_prefetch=0,
            grid=grid,
            in_specs=[
                pl.BlockSpec(memory_space=pltpu.MemorySpace.SMEM),    # scale (1,)
                pl.BlockSpec((block_rows, _LANE), lambda i: (i, 0)),  # x slab
            ],
            out_specs=pl.BlockSpec((block_rows, _LANE), lambda i: (i, 0)),
        ),
        compiler_params=pltpu.CompilerParams(
            dimension_semantics=("parallel",),
            vmem_limit_bytes=vmem_limit,
        ),
        cost_estimate=pl.CostEstimate(
            flops=n_main,
            transcendentals=0,
            bytes_accessed=2 * n_main * itemsize,
        ),
        **extra_kwargs,
    )(scale_arr, x2)

    out_flat = out2.reshape(-1)
    if n_tail:
        tail = (flat[n_main:].astype(jnp.float32) * scale).astype(dtype)
        out_flat = jnp.concatenate([out_flat, tail])
    return out_flat.reshape(orig_shape)


def _reference_forward(x, z_phi, u, *, k=K_CONST):
    """Pure-JAX reference mirroring the PyTorch concretedp training forward."""
    pi = jax.nn.sigmoid(k * z_phi.astype(jnp.float32))
    drop_prob = jax.nn.sigmoid(
        (jnp.log(pi + EPS) - jnp.log(1.0 - pi + EPS)
         + jnp.log(u + EPS) - jnp.log(1.0 - u + EPS)) / TEMP)
    random_tensor = 1.0 - drop_prob
    retain_prob = 1.0 - pi
    return (x.astype(jnp.float32) * random_tensor / retain_prob).astype(x.dtype)


if __name__ == "__main__":
    key = jax.random.PRNGKey(0)
    k1, k2, k3, k_u = jax.random.split(key, 4)

    # Parameter z_phi initialized deterministically as in __init__ (eta_const).
    z_phi = jnp.full((1,), ETA_CONST, dtype=jnp.float32)
    # Scalar uniform noise (torch.rand_like(pi) with pi of shape [1]).
    u = jax.random.uniform(k_u, (1,), dtype=jnp.float32)

    test_cases = [
        # tiny NCHW input -> wrapper fast path (no pallas_call)
        jax.random.normal(k1, (2, 4, 16, 16), dtype=jnp.float32),
        # lane-aligned element count -> Pallas kernel path, 2-step parallel grid
        jax.random.normal(k2, (2, 4, 128, 128), dtype=jnp.float32),
        # non-128-aligned element count -> kernel on prefix + jnp tail
        jax.random.normal(k3, (5, 97, 137), dtype=jnp.float32),
    ]

    for x in test_cases:
        y = dropout_variants_forward(x, z_phi, u)
        y = jax.block_until_ready(y)
        y_ref = _reference_forward(x, z_phi, u)
        np.testing.assert_allclose(np.asarray(y), np.asarray(y_ref),
                                   rtol=1e-5, atol=1e-5)

    # TODO(synk): regularization term + `.backward()` side effects (post/prior NLL
    # bookkeeping, phi gradient updates) are training-time autograd state, not part
    # of the forward output tensor, so they are not reproduced here.

    print("KERNEL_OK")
</pallas_src>

<mosaic_0001>
module attributes {stable_mosaic.version = 11 : i64} {
  func.func @_scale_kernel(%arg0: i32, %arg1: memref<1xf32, #tpu.memory_space<smem>>, %arg2: memref<512x128xf32, #tpu.memory_space<vmem>>, %arg3: memref<512x128xf32, #tpu.memory_space<vmem>>) attributes {dimension_semantics = [#tpu.dimension_semantics<parallel>], iteration_bounds = array<i64: 2>, scalar_prefetch = 0 : i64, scratch_operands = 0 : i64, tpu.core_type = #tpu.core_type<tc>, window_params = [{transform_indices = @transform_0, window_bounds = array<i64: 1>}, {transform_indices = @transform_1, window_bounds = array<i64: 512, 128>}, {transform_indices = @transform_2, window_bounds = array<i64: 512, 128>}]} {
    %c0 = arith.constant 0 : index
    %0 = memref.load %arg1[%c0] : memref<1xf32, #tpu.memory_space<smem>>
    %c0_0 = arith.constant 0 : index
    %c0_1 = arith.constant 0 : index
    %1 = vector.load %arg2[%c0_0, %c0_1] : memref<512x128xf32, #tpu.memory_space<vmem>>, vector<512x128xf32>
    %2 = vector.broadcast %0 : f32 to vector<512x128xf32>
    %3 = arith.mulf %1, %2 : vector<512x128xf32>
    %c0_2 = arith.constant 0 : index
    %c0_3 = arith.constant 0 : index
    %4 = vector.load %arg3[%c0_2, %c0_3] : memref<512x128xf32, #tpu.memory_space<vmem>>, vector<512x128xf32>
    tpu.vector_store %arg3[%c0_2, %c0_3], %3 {strides = array<i32>} : memref<512x128xf32, #tpu.memory_space<vmem>>, vector<512x128xf32>,
    return
  }
  func.func @transform_0(%arg0: i32) -> i32 {
    %c0_i32 = arith.constant 0 : i32
    %c0_i32_0 = arith.constant 0 : i32
    return %c0_i32 : i32
  }
  func.func @transform_1(%arg0: i32) -> (i32, i32) {
    %c0_i32 = arith.constant 0 : i32
    %c0_i32_0 = arith.constant 0 : i32
    return %arg0, %c0_i32 : i32, i32
  }
  func.func @transform_2(%arg0: i32) -> (i32, i32) {
    %c0_i32 = arith.constant 0 : i32
    %c0_i32_0 = arith.constant 0 : i32
    return %arg0, %c0_i32 : i32, i32
  }
}

</mosaic_0001>

<llo_original>
// kernel: tpu_custom_call.1
$region0: #{tpu_custom_call.1}
  #allocation0 [shape = 'u32[]', space=smem, size = 0x4, offset = 0x4, fixed_abs, tag = 'smem constant byte address 0x4 - core index']
  #allocation1 [shape = 'u32[72,128]{1,0:T(1,128)}', space=vmem, size = 0x9000, scoped, tag = 'internal scratch']
  #allocation2 [shape = 'f32[1]{0:T(128)S(6)}', space=smem, size = 0x200, scoped, tag = 'scoped memory for tpu_custom_call.1']
  %s0 = inlined_call_operand.<no memory space> [shape: f32[1], index: 0, kind: input, shape index: {}]
  %s1 = inlined_call_operand.hbm [shape: f32[1024,128], index: 1, kind: input, shape index: {}]
  %s2 = inlined_call_operand.hbm [shape: f32[1024,128], index: 2, kind: output, shape index: {}]
  %s3 = sld [smem:[#allocation0]]
  $region45: #{tpu_custom_call.1} parent=0
    _
  %s5 = ssub.s32 1, %s3
  %s6 = scalar_select 0, %s5, %s3
  %7 = sst [smem:[#allocation2]] %s0
  $region1: #{tpu_custom_call.1} parent=0
    #allocation3 [shape = 'u8[524288]{0}', space=vmem, size = 0x80000, scoped, tag = 'input window, operand 1']
    #allocation4 [shape = 's32[2]{0}', space=sflag, size = 0x8, scoped, tag = 'scoped memory for tpu_custom_call.1']
    #allocation5 [shape = 's32[2]{0}', space=sflag, size = 0x8, scoped, tag = 'scoped memory for tpu_custom_call.1']
    #allocation6 [shape = 'u8[524288]{0}', space=vmem, size = 0x80000, scoped, tag = 'output window, operand 0']
    %8 = vsyncpa [#allocation4], 0
    %s9 = scalar_lea.sflag [#allocation4], 1
    %10 = vsyncpa %s9, 0
    %11 = vsyncpa [#allocation5], 0
    %s12 = scalar_lea.sflag [#allocation5], 1
    %13 = vsyncpa %s12, 0
    loop: start=0, step=1, limit=4
    $region2: #{tpu_custom_call.1} parent=1 // loop_pre_header
      _
    $region3: #{tpu_custom_call.1} parent=1 // loop_header
      %s15 = sphi 0, %s19
      %p16 = scmp.ge.s32.totalorder %s15, 4
      %s23 = sphi 0, %s23
      %s25 = sphi 0, %s23
      %s26 = sphi 0, %s25
      %s40 = sphi 0, %s26
      %s46 = sphi 0, %s48
      %s49 = sphi 0, %s46
      %s50 = sphi 0, %s49
      %s66 = sphi 0, %s50
      %s72 = sphi 0, %s74
      %s75 = sphi 0, %s72
      %s76 = sphi 0, %s75
      %s92 = sphi 0, %s76
    $region4: #{tpu_custom_call.1} parent=1 // loop_header_branch
      %18 = sbr.rel (%p16) target = $region8
    $region5: #{tpu_custom_call.1} parent=1 // loop_body
      %s20 = ssub.s32 %s15, 1
      %s21 = ssub.s32 %s15, 2
      %s22 = sadd.s32 %s15, 1
      %s24 = sadd.s32 %s23, 1
      %p27 = scmp.eq.s32.totalorder %s15, 1
      %p28 = scmp.ne.s32.totalorder %s23, %s25
      %p29 = scmp.eq.s32.totalorder %s15, 0
      %p30 = por %p28, %p29
      %p31 = scmp.ne.s32.totalorder %s23, %s25
      %p32 = scmp.eq.s32.totalorder %s20, 1
      %p33 = por %p31, %p32
      %p34 = scmp.ne.s32.totalorder %s25, %s26
      %p35 = scmp.eq.s32.totalorder %s20, 0
      %p36 = por %p34, %p35
      %p37 = scmp.ne.s32.totalorder %s25, %s26
      %p38 = scmp.eq.s32.totalorder %s21, 1
      %p39 = por %p37, %p38
      %p41 = scmp.ne.s32.totalorder %s26, %s40
      %p42 = scmp.eq.s32.totalorder %s21, 0
      %p43 = por %p41, %p42
      %s44 = ssub.s32 %s15, %s22
      %p45 = scmp.eq.s32.totalorder %s44, 0
      %s47 = sadd.s32 %s46, 1
      %s48 = scalar_select %p45, %s46, %s47
      %p51 = pneg %p45
      %p52 = scmp.eq.s32.totalorder %s15, 1
      %p53 = por %p51, %p52
      %p54 = scmp.ne.s32.totalorder %s46, %s49
      %p55 = scmp.eq.s32.totalorder %s15, 0
      %p56 = por %p54, %p55
      %p57 = scmp.ne.s32.totalorder %s46, %s49
      %p58 = scmp.eq.s32.totalorder %s20, 1
      %p59 = por %p57, %p58
      %p60 = scmp.ne.s32.totalorder %s49, %s50
      %p61 = scmp.eq.s32.totalorder %s20, 0
      %p62 = por %p60, %p61
      %p63 = scmp.ne.s32.totalorder %s49, %s50
      %p64 = scmp.eq.s32.totalorder %s21, 1
      %p65 = por %p63, %p64
      %p67 = scmp.ne.s32.totalorder %s50, %s66
      %p68 = scmp.eq.s32.totalorder %s21, 0
      %p69 = por %p67, %p68
      %s70 = ssub.s32 %s15, %s22
      %p71 = scmp.eq.s32.totalorder %s70, 0
      %s73 = sadd.s32 %s72, 1
      %s74 = scalar_select %p71, %s72, %s73
      %p77 = pneg %p71
      %p78 = scmp.eq.s32.totalorder %s15, 1
      %p79 = por %p77, %p78
      %p80 = scmp.ne.s32.totalorder %s72, %s75
      %p81 = scmp.eq.s32.totalorder %s15, 0
      %p82 = por %p80, %p81
      %p83 = scmp.ne.s32.totalorder %s72, %s75
      %p84 = scmp.eq.s32.totalorder %s20, 1
      %p85 = por %p83, %p84
      %p86 = scmp.ne.s32.totalorder %s75, %s76
      %p87 = scmp.eq.s32.totalorder %s20, 0
      %p88 = por %p86, %p87
      %p89 = scmp.ne.s32.totalorder %s75, %s76
      %p90 = scmp.eq.s32.totalorder %s21, 1
      %p91 = por %p89, %p90
      %p93 = scmp.ne.s32.totalorder %s76, %s92
      %p94 = scmp.eq.s32.totalorder %s21, 0
      %p95 = por %p93, %p94
      %p96 = scmp.le.s32.totalorder 1, %s15
      %p97 = scmp.lt.s32.totalorder %s15, 3
      %p98 = pnand %p96, %p97
      %p99 = pneg %p98
      // Predicated region
      $region9: #{tpu_custom_call.1} parent=5 // pred_check
        _
      $region10: #{tpu_custom_call.1} parent=5 // pred_check_branch
        %101 = sbr.rel (%p98) target = $region12
      $region11: #{tpu_custom_call.1} parent=5 // pred_region
        %s102 = ssub.s32 %s15, 1
        // Predicated region
        $region13: #{tpu_custom_call.1} parent=11 // pred_check
          %p103 = pneg %p36
        $region14: #{tpu_custom_call.1} parent=11 // pred_check_branch
          %105 = sbr.rel (%p103) target = $region16
        $region15: #{tpu_custom_call.1} parent=11 // pred_region
          _
        $region16: #{tpu_custom_call.1} parent=11 // pred_fallthru
          _
      $region12: #{tpu_custom_call.1} parent=5 // pred_fallthru
        _
      %p106 = scmp.lt.s32.totalorder %s15, 2
      // Predicated region
      $region17: #{tpu_custom_call.1} parent=5 // pred_check
        %p107 = pneg %p106
      $region18: #{tpu_custom_call.1} parent=5 // pred_check_branch
        %109 = sbr.rel (%p107) target = $region20
      $region19: #{tpu_custom_call.1} parent=5 // pred_region
        // Predicated region
        $region21: #{tpu_custom_call.1} parent=19 // pred_check
          %p110 = pneg %p56
        $region22: #{tpu_custom_call.1} parent=19 // pred_check_branch
          %112 = sbr.rel (%p110) target = $region24
        $region23: #{tpu_custom_call.1} parent=19 // pred_region
          %s113 = sand.u32 %s46, 1
          %s114 = scalar_lea.sflag [#allocation4], %s113
          %s115 = sand.u32 %s46, 1
          %s116 = smul.addr %s115, 512
          %s117 = scalar_lea.vmem [#allocation3], %s116
          %s118 = smul.u32 64, %s15
          %120 = vsyncadd %s114, 0
          %s121 = smul.addr %s118, 8
          %s122 = scalar_lea.hbm %s1, %s121
          %s123 = sshll.u32 %s122, 4
          %s124 = int_to_ptr.hbm [resolvable:$true] %s123
          %s125 = sshll.u32 %s117, 4
          %s126 = int_to_ptr.vmem [resolvable:$true] %s125
          %131 = dma.hbm_to_vmem [thread:$0]  %s124, 8192, %s126, %s114, 128, 128, 8
        $region24: #{tpu_custom_call.1} parent=19 // pred_fallthru
          _
      $region20: #{tpu_custom_call.1} parent=5 // pred_fallthru
        _
      %p132 = scmp.le.s32.totalorder 1, %s15
      %p133 = scmp.lt.s32.totalorder %s15, 3
      %p134 = pnand %p132, %p133
      %p135 = pneg %p134
      // Predicated region
      $region25: #{tpu_custom_call.1} parent=5 // pred_check
        _
      $region26: #{tpu_custom_call.1} parent=5 // pred_check_branch
        %137 = sbr.rel (%p134) target = $region28
      $region27: #{tpu_custom_call.1} parent=5 // pred_region
        %s138 = ssub.s32 %s15, 1
        %s139 = sand.u32 %s49, 1
        %s140 = scalar_lea.sflag [#allocation4], %s139
        %s141 = sand.u32 %s49, 1
        %s142 = smul.addr %s141, 512
        %s143 = scalar_lea.vmem [#allocation3], %s142
        // Predicated region
        $region29: #{tpu_custom_call.1} parent=27 // pred_check
          %p144 = pneg %p62
        $region30: #{tpu_custom_call.1} parent=27 // pred_check_branch
          %146 = sbr.rel (%p144) target = $region32
        $region31: #{tpu_custom_call.1} parent=27 // pred_region
          %148 = dma.done %s140, 8192
        $region32: #{tpu_custom_call.1} parent=27 // pred_fallthru
          _
        %p149 = pneg %p36
        %p150 = pneg %p33
        %s151 = sand.u32 %s49, 1
        %s152 = scalar_lea.sflag [#allocation4], %s151
        %s153 = sand.u32 %s49, 1
        %s154 = smul.addr %s153, 512
        %s155 = scalar_lea.vmem [#allocation3], %s154
        %p156 = pneg %p62
        %p157 = pneg %p59
        %p158 = pneg %p88
        %p159 = pneg %p85
        %s160 = sand.u32 %s75, 1
        %s161 = scalar_lea.sflag [#allocation5], %s160
        %s162 = sand.u32 %s75, 1
        %s163 = smul.addr %s162, 512
        %s164 = scalar_lea.vmem [#allocation6], %s163
        %s165 = smul.u32 64, %s20
        %s166 = smul.u32 64, %s20
        %s167 = sld [smem:[#allocation2]]
        %v168 = vld [vmem:[%s143] sm:$0xff]
        %v169 = vld [vmem:[%s143 + $0x8] sm:$0xff]
        %v170 = vld [vmem:[%s143 + $0x10] sm:$0xff]
        %v171 = vld [vmem:[%s143 + $0x18] sm:$0xff]
        %v172 = vld [vmem:[%s143 + $0x20] sm:$0xff]
        %v173 = vld [vmem:[%s143 + $0x28] sm:$0xff]
        %v174 = vld [vmem:[%s143 + $0x30] sm:$0xff]
        %v175 = vld [vmem:[%s143 + $0x38] sm:$0xff]
        %v176 = vld [vmem:[%s143 + $0x40] sm:$0xff]
        %v177 = vld [vmem:[%s143 + $0x48] sm:$0xff]
        %v178 = vld [vmem:[%s143 + $0x50] sm:$0xff]
        %v179 = vld [vmem:[%s143 + $0x58] sm:$0xff]
        %v180 = vld [vmem:[%s143 + $0x60] sm:$0xff]
        %v181 = vld [vmem:[%s143 + $0x68] sm:$0xff]
        %v182 = vld [vmem:[%s143 + $0x70] sm:$0xff]
        %v183 = vld [vmem:[%s143 + $0x78] sm:$0xff]
        %v184 = vld [vmem:[%s143 + $0x80] sm:$0xff]
        %v185 = vld [vmem:[%s143 + $0x88] sm:$0xff]
        %v186 = vld [vmem:[%s143 + $0x90] sm:$0xff]
        %v187 = vld [vmem:[%s143 + $0x98] sm:$0xff]
        %v188 = vld [vmem:[%s143 + $0xa0] sm:$0xff]
        %v189 = vld [vmem:[%s143 + $0xa8] sm:$0xff]
        %v190 = vld [vmem:[%s143 + $0xb0] sm:$0xff]
        %v191 = vld [vmem:[%s143 + $0xb8] sm:$0xff]
        %v192 = vld [vmem:[%s143 + $0xc0] sm:$0xff]
        %v193 = vld [vmem:[%s143 + $0xc8] sm:$0xff]
        %v194 = vld [vmem:[%s143 + $0xd0] sm:$0xff]
        %v195 = vld [vmem:[%s143 + $0xd8] sm:$0xff]
        %v196 = vld [vmem:[%s143 + $0xe0] sm:$0xff]
        %v197 = vld [vmem:[%s143 + $0xe8] sm:$0xff]
        %v198 = vld [vmem:[%s143 + $0xf0] sm:$0xff]
        %v199 = vld [vmem:[%s143 + $0xf8] sm:$0xff]
        %v200 = vld [vmem:[%s143 + $0x100] sm:$0xff]
        %v201 = vld [vmem:[%s143 + $0x108] sm:$0xff]
        %v202 = vld [vmem:[%s143 + $0x110] sm:$0xff]
        %v203 = vld [vmem:[%s143 + $0x118] sm:$0xff]
        %v204 = vld [vmem:[%s143 + $0x120] sm:$0xff]
        %v205 = vld [vmem:[%s143 + $0x128] sm:$0xff]
        %v206 = vld [vmem:[%s143 + $0x130] sm:$0xff]
        %v207 = vld [vmem:[%s143 + $0x138] sm:$0xff]
        %v208 = vld [vmem:[%s143 + $0x140] sm:$0xff]
        %v209 = vld [vmem:[%s143 + $0x148] sm:$0xff]
        %v210 = vld [vmem:[%s143 + $0x150] sm:$0xff]
        %v211 = vld [vmem:[%s143 + $0x158] sm:$0xff]
        %v212 = vld [vmem:[%s143 + $0x160] sm:$0xff]
        %v213 = vld [vmem:[%s143 + $0x168] sm:$0xff]
        %v214 = vld [vmem:[%s143 + $0x170] sm:$0xff]
        %v215 = vld [vmem:[%s143 + $0x178] sm:$0xff]
        %v216 = vld [vmem:[%s143 + $0x180] sm:$0xff]
        %v217 = vld [vmem:[%s143 + $0x188] sm:$0xff]
        %v218 = vld [vmem:[%s143 + $0x190] sm:$0xff]
        %v219 = vld [vmem:[%s143 + $0x198] sm:$0xff]
        %v220 = vld [vmem:[%s143 + $0x1a0] sm:$0xff]
        %v221 = vld [vmem:[%s143 + $0x1a8] sm:$0xff]
        %v222 = vld [vmem:[%s143 + $0x1b0] sm:$0xff]
        %v223 = vld [vmem:[%s143 + $0x1b8] sm:$0xff]
        %v224 = vld [vmem:[%s143 + $0x1c0] sm:$0xff]
        %v225 = vld [vmem:[%s143 + $0x1c8] sm:$0xff]
        %v226 = vld [vmem:[%s143 + $0x1d0] sm:$0xff]
        %v227 = vld [vmem:[%s143 + $0x1d8] sm:$0xff]
        %v228 = vld [vmem:[%s143 + $0x1e0] sm:$0xff]
        %v229 = vld [vmem:[%s143 + $0x1e8] sm:$0xff]
        %v230 = vld [vmem:[%s143 + $0x1f0] sm:$0xff]
        %v231 = vld [vmem:[%s143 + $0x1f8] sm:$0xff]
        %v232 = vstv %s167
        %v233 = vmul.f32 %v168, %v232
        %v234 = vmul.f32 %v169, %v232
        %v235 = vmul.f32 %v170, %v232
        %v236 = vmul.f32 %v171, %v232
        %v237 = vmul.f32 %v172, %v232
        %v238 = vmul.f32 %v173, %v232
        %v239 = vmul.f32 %v174, %v232
        %v240 = vmul.f32 %v175, %v232
        %v241 = vmul.f32 %v176, %v232
        %v242 = vmul.f32 %v177, %v232
        %v243 = vmul.f32 %v178, %v232
        %v244 = vmul.f32 %v179, %v232
        %v245 = vmul.f32 %v180, %v232
        %v246 = vmul.f32 %v181, %v232
        %v247 = vmul.f32 %v182, %v232
        %v248 = vmul.f32 %v183, %v232
        %v249 = vmul.f32 %v184, %v232
        %v250 = vmul.f32 %v185, %v232
        %v251 = vmul.f32 %v186, %v232
        %v252 = vmul.f32 %v187, %v232
        %v253 = vmul.f32 %v188, %v232
        %v254 = vmul.f32 %v189, %v232
        %v255 = vmul.f32 %v190, %v232
        %v256 = vmul.f32 %v191, %v232
        %v257 = vmul.f32 %v192, %v232
        %v258 = vmul.f32 %v193, %v232
        %v259 = vmul.f32 %v194, %v232
        %v260 = vmul.f32 %v195, %v232
        %v261 = vmul.f32 %v196, %v232
        %v262 = vmul.f32 %v197, %v232
        %v263 = vmul.f32 %v198, %v232
        %v264 = vmul.f32 %v199, %v232
        %v265 = vmul.f32 %v200, %v232
        %v266 = vmul.f32 %v201, %v232
        %v267 = vmul.f32 %v202, %v232
        %v268 = vmul.f32 %v203, %v232
        %v269 = vmul.f32 %v204, %v232
        %v270 = vmul.f32 %v205, %v232
        %v271 = vmul.f32 %v206, %v232
        %v272 = vmul.f32 %v207, %v232
        %v273 = vmul.f32 %v208, %v232
        %v274 = vmul.f32 %v209, %v232
        %v275 = vmul.f32 %v210, %v232
        %v276 = vmul.f32 %v211, %v232
        %v277 = vmul.f32 %v212, %v232
        %v278 = vmul.f32 %v213, %v232
        %v279 = vmul.f32 %v214, %v232
        %v280 = vmul.f32 %v215, %v232
        %v281 = vmul.f32 %v216, %v232
        %v282 = vmul.f32 %v217, %v232
        %v283 = vmul.f32 %v218, %v232
        %v284 = vmul.f32 %v219, %v232
        %v285 = vmul.f32 %v220, %v232
        %v286 = vmul.f32 %v221, %v232
        %v287 = vmul.f32 %v222, %v232
        %v288 = vmul.f32 %v223, %v232
        %v289 = vmul.f32 %v224, %v232
        %v290 = vmul.f32 %v225, %v232
        %v291 = vmul.f32 %v226, %v232
        %v292 = vmul.f32 %v227, %v232
        %v293 = vmul.f32 %v228, %v232
        %v294 = vmul.f32 %v229, %v232
        %v295 = vmul.f32 %v230, %v232
        %v296 = vmul.f32 %v231, %v232
        %297 = vst [vmem:[%s164] sm:$0xff] %v233
        %298 = vst [vmem:[%s164 + $0x8] sm:$0xff] %v234
        %299 = vst [vmem:[%s164 + $0x10] sm:$0xff] %v235
        %300 = vst [vmem:[%s164 + $0x18] sm:$0xff] %v236
        %301 = vst [vmem:[%s164 + $0x20] sm:$0xff] %v237
        %302 = vst [vmem:[%s164 + $0x28] sm:$0xff] %v238
        %303 = vst [vmem:[%s164 + $0x30] sm:$0xff] %v239
        %304 = vst [vmem:[%s164 + $0x38] sm:$0xff] %v240
        %305 = vst [vmem:[%s164 + $0x40] sm:$0xff] %v241
        %306 = vst [vmem:[%s164 + $0x48] sm:$0xff] %v242
        %307 = vst [vmem:[%s164 + $0x50] sm:$0xff] %v243
        %308 = vst [vmem:[%s164 + $0x58] sm:$0xff] %v244
        %309 = vst [vmem:[%s164 + $0x60] sm:$0xff] %v245
        %310 = vst [vmem:[%s164 + $0x68] sm:$0xff] %v246
        %311 = vst [vmem:[%s164 + $0x70] sm:$0xff] %v247
        %312 = vst [vmem:[%s164 + $0x78] sm:$0xff] %v248
        %313 = vst [vmem:[%s164 + $0x80] sm:$0xff] %v249
        %314 = vst [vmem:[%s164 + $0x88] sm:$0xff] %v250
        %315 = vst [vmem:[%s164 + $0x90] sm:$0xff] %v251
        %316 = vst [vmem:[%s164 + $0x98] sm:$0xff] %v252
        %317 = vst [vmem:[%s164 + $0xa0] sm:$0xff] %v253
        %318 = vst [vmem:[%s164 + $0xa8] sm:$0xff] %v254
        %319 = vst [vmem:[%s164 + $0xb0] sm:$0xff] %v255
        %320 = vst [vmem:[%s164 + $0xb8] sm:$0xff] %v256
        %321 = vst [vmem:[%s164 + $0xc0] sm:$0xff] %v257
        %322 = vst [vmem:[%s164 + $0xc8] sm:$0xff] %v258
        %323 = vst [vmem:[%s164 + $0xd0] sm:$0xff] %v259
        %324 = vst [vmem:[%s164 + $0xd8] sm:$0xff] %v260
        %325 = vst [vmem:[%s164 + $0xe0] sm:$0xff] %v261
        %326 = vst [vmem:[%s164 + $0xe8] sm:$0xff] %v262
        %327 = vst [vmem:[%s164 + $0xf0] sm:$0xff] %v263
        %328 = vst [vmem:[%s164 + $0xf8] sm:$0xff] %v264
        %329 = vst [vmem:[%s164 + $0x100] sm:$0xff] %v265
        %330 = vst [vmem:[%s164 + $0x108] sm:$0xff] %v266
        %331 = vst [vmem:[%s164 + $0x110] sm:$0xff] %v267
        %332 = vst [vmem:[%s164 + $0x118] sm:$0xff] %v268
        %333 = vst [vmem:[%s164 + $0x120] sm:$0xff] %v269
        %334 = vst [vmem:[%s164 + $0x128] sm:$0xff] %v270
        %335 = vst [vmem:[%s164 + $0x130] sm:$0xff] %v271
        %336 = vst [vmem:[%s164 + $0x138] sm:$0xff] %v272
        %337 = vst [vmem:[%s164 + $0x140] sm:$0xff] %v273
        %338 = vst [vmem:[%s164 + $0x148] sm:$0xff] %v274
        %339 = vst [vmem:[%s164 + $0x150] sm:$0xff] %v275
        %340 = vst [vmem:[%s164 + $0x158] sm:$0xff] %v276
        %341 = vst [vmem:[%s164 + $0x160] sm:$0xff] %v277
        %342 = vst [vmem:[%s164 + $0x168] sm:$0xff] %v278
        %343 = vst [vmem:[%s164 + $0x170] sm:$0xff] %v279
        %344 = vst [vmem:[%s164 + $0x178] sm:$0xff] %v280
        %345 = vst [vmem:[%s164 + $0x180] sm:$0xff] %v281
        %346 = vst [vmem:[%s164 + $0x188] sm:$0xff] %v282
        %347 = vst [vmem:[%s164 + $0x190] sm:$0xff] %v283
        %348 = vst [vmem:[%s164 + $0x198] sm:$0xff] %v284
        %349 = vst [vmem:[%s164 + $0x1a0] sm:$0xff] %v285
        %350 = vst [vmem:[%s164 + $0x1a8] sm:$0xff] %v286
        %351 = vst [vmem:[%s164 + $0x1b0] sm:$0xff] %v287
        %352 = vst [vmem:[%s164 + $0x1b8] sm:$0xff] %v288
        %353 = vst [vmem:[%s164 + $0x1c0] sm:$0xff] %v289
        %354 = vst [vmem:[%s164 + $0x1c8] sm:$0xff] %v290
        %355 = vst [vmem:[%s164 + $0x1d0] sm:$0xff] %v291
        %356 = vst [vmem:[%s164 + $0x1d8] sm:$0xff] %v292
        %357 = vst [vmem:[%s164 + $0x1e0] sm:$0xff] %v293
        %358 = vst [vmem:[%s164 + $0x1e8] sm:$0xff] %v294
        %359 = vst [vmem:[%s164 + $0x1f0] sm:$0xff] %v295
        %360 = vst [vmem:[%s164 + $0x1f8] sm:$0xff] %v296
        %s361 = sand.u32 %s75, 1
        %s362 = scalar_lea.sflag [#allocation5], %s361
        %s363 = sand.u32 %s75, 1
        %s364 = smul.addr %s363, 512
        %s365 = scalar_lea.vmem [#allocation6], %s364
        // Predicated region
        $region33: #{tpu_custom_call.1} parent=27 // pred_check
          %p366 = pneg %p85
        $region34: #{tpu_custom_call.1} parent=27 // pred_check_branch
          %368 = sbr.rel (%p366) target = $region36
        $region35: #{tpu_custom_call.1} parent=27 // pred_region
          %s369 = smul.u32 64, %s20
          %371 = vsyncadd %s362, 0
          %s372 = smul.addr %s369, 8
          %s373 = scalar_lea.hbm %s2, %s372
          %s374 = sshll.u32 %s365, 4
          %s375 = int_to_ptr.vmem [resolvable:$true] %s374
          %s376 = sshll.u32 %s373, 4
          %s377 = int_to_ptr.hbm [resolvable:$true] %s376
          %382 = dma.vmem_to_hbm [thread:$0]  %s375, 8192, %s377, %s362, 128, 128, 8
        $region36: #{tpu_custom_call.1} parent=27 // pred_fallthru
          _
      $region28: #{tpu_custom_call.1} parent=5 // pred_fallthru
        _
      %p383 = scmp.le.s32.totalorder 2, %s15
      // Predicated region
      $region37: #{tpu_custom_call.1} parent=5 // pred_check
        %p384 = pneg %p383
      $region38: #{tpu_custom_call.1} parent=5 // pred_check_branch
        %386 = sbr.rel (%p384) target = $region40
      $region39: #{tpu_custom_call.1} parent=5 // pred_region
        %s387 = ssub.s32 %s15, 2
        // Predicated region
        $region41: #{tpu_custom_call.1} parent=39 // pred_check
          %p388 = pneg %p91
        $region42: #{tpu_custom_call.1} parent=39 // pred_check_branch
          %390 = sbr.rel (%p388) target = $region44
        $region43: #{tpu_custom_call.1} parent=39 // pred_region
          %s391 = sand.u32 %s76, 1
          %s392 = scalar_lea.sflag [#allocation5], %s391
          %s393 = sand.u32 %s76, 1
          %s394 = smul.addr %s393, 512
          %s395 = scalar_lea.vmem [#allocation6], %s394
          %397 = dma.done %s392, 8192
        $region44: #{tpu_custom_call.1} parent=39 // pred_fallthru
          _
      $region40: #{tpu_custom_call.1} parent=5 // pred_fallthru
        _
    $region6: #{tpu_custom_call.1} parent=1 // loop_footer
      %s19 = sadd.s32 1, %s15
    $region7: #{tpu_custom_call.1} parent=1 // loop_footer_branch
      %14 = sbr.rel target = $region3
    $region8: #{tpu_custom_call.1} parent=1 // loop_exit
      _
    %398 = vsyncpa [#allocation4], 1
    %s399 = scalar_lea.sflag [#allocation4], 1
    %400 = vsyncpa %s399, 1
    %401 = vsyncpa [#allocation5], 1
    %s402 = scalar_lea.sflag [#allocation5], 1
    %403 = vsyncpa %s402, 1

</llo_original>
